<compile_context>
chip_gen: v7x
topology: tpu7x:2x2x1
jax: 0.10.0
libtpu: 0.0.40
codegen_flags: <defaults>
</compile_context>

<pallas_src>
import functools

import jax
import jax.numpy as jnp
from jax.experimental import pallas as pl
from jax.experimental.pallas import tpu as pltpu


def _round_up(x, m):
    return (x + m - 1) // m * m


@functools.partial(jax.jit, static_argnames=("max_value", "tile_hw"))
def image_bow_embedding(x, emb_weight, *, max_value, tile_hw=512):
    """x: (B, 3, H, W) float32 NCHW.  emb_weight: (3*max_value, E) float32.

    Returns (B, E, H, W) float32, matching ImageBOWEmbedding.forward.
    """
    B, C, H, W = x.shape
    assert C == 3
    vocab, E = emb_weight.shape
    assert vocab == 3 * max_value
    assert tile_hw % 128 == 0

    HW = H * W
    # Pixel tile: multiple of 128 (lane-dense), no bigger than needed.
    t = min(tile_hw, _round_up(HW, 128))
    HW_pad = _round_up(HW, t)

    slab = _round_up(max_value, 8)        # per-channel slab stride (rows)
    vpad = _round_up(3 * slab, 128)       # padded vocab / MXU K dim
    tail = vpad - 3 * slab

    # (free) NCHW -> (B, 3, HW); pad the pixel axis to a tile multiple.
    x_flat = x.reshape(B, C, HW)
    if HW_pad != HW:
        x_flat = jnp.pad(x_flat, ((0, 0), (0, 0), (0, HW_pad - HW)))

    # Pad + transpose the embedding table once: channel-c rows live at
    # offset c*slab, everything else is zero.  Shape (E, vpad), lane-dense.
    emb_pad = jnp.zeros((vpad, E), jnp.float32)
    for c in range(3):
        emb_pad = emb_pad.at[c * slab:c * slab + max_value, :].set(
            emb_weight[c * max_value:(c + 1) * max_value, :].astype(jnp.float32))
    emb_t = emb_pad.T                      # (E, vpad)

    def kernel(x_ref, emb_t_ref, out_ref, counts_ref):
        # x_ref:      (1, 3, t) f32   raw channel values for t pixels
        # emb_t_ref:  (E, vpad) f32   padded, transposed embedding table
        # out_ref:    (1, E, t) f32
        # counts_ref: (vpad, t) f32   VMEM scratch: transposed one-hot counts
        idx = x_ref[0].astype(jnp.int32)                        # (3, t)
        row_iota = jax.lax.broadcasted_iota(jnp.int32, (slab, t), 0)
        for c in range(3):
            onehot = (row_iota == idx[c:c + 1, :]).astype(jnp.float32)
            counts_ref[pl.ds(c * slab, slab), :] = onehot       # 8-aligned slab
        if tail:
            # keep the padded-K rows well defined (scratch is uninitialized;
            # their table columns are zero, but NaN * 0 would still be NaN).
            counts_ref[pl.ds(3 * slab, tail), :] = jnp.zeros(
                (tail, t), jnp.float32)
        out_ref[0] = jnp.dot(emb_t_ref[...], counts_ref[...],
                             preferred_element_type=jnp.float32)

    out_pad = pl.pallas_call(
        kernel,
        out_shape=jax.ShapeDtypeStruct((B, E, HW_pad), jnp.float32),
        grid_spec=pltpu.PrefetchScalarGridSpec(
            num_scalar_prefetch=0,
            grid=(B, HW_pad // t),
            in_specs=[
                pl.BlockSpec((1, C, t), lambda b, i: (b, 0, i)),
                pl.BlockSpec((E, vpad), lambda b, i: (0, 0)),   # VMEM-resident
            ],
            out_specs=pl.BlockSpec((1, E, t), lambda b, i: (b, 0, i)),
            scratch_shapes=[pltpu.VMEM((vpad, t), jnp.float32)],
        ),
        compiler_params=pltpu.CompilerParams(
            dimension_semantics=("parallel", "parallel")),
    )(x_flat, emb_t)

    out = out_pad[:, :, :HW] if HW_pad != HW else out_pad
    return out.reshape(B, E, H, W)


def _reference(x, emb_weight, max_value):
    # pure-JAX reference of the PyTorch forward
    offsets = jnp.array([0, max_value, 2 * max_value], jnp.int32)
    idx = x.astype(jnp.int32) + offsets[None, :, None, None]     # (B,3,H,W)
    emb = emb_weight[idx]                                        # (B,3,H,W,E)
    return emb.sum(axis=1).transpose(0, 3, 1, 2)                 # (B,E,H,W)


if __name__ == "__main__":
    max_value = 147
    embedding_dim = 128

    key = jax.random.PRNGKey(0)
    k_emb, k1, k2 = jax.random.split(key, 3)

    # deterministic synthetic parameters (Embedding(3*max_value, 128))
    emb_weight = 0.02 * jax.random.normal(
        k_emb, (3 * max_value, embedding_dim), jnp.float32)

    # check 1: small BabyAI-like image -> exercises pixel padding (64 -> 128)
    x1 = jax.random.randint(
        k1, (2, 3, 8, 8), 0, max_value, jnp.int32).astype(jnp.float32)
    out1 = jax.block_until_ready(
        image_bow_embedding(x1, emb_weight, max_value=max_value))
    ref1 = _reference(x1, emb_weight, max_value)
    assert out1.shape == (2, embedding_dim, 8, 8)
    assert jnp.allclose(out1, ref1, atol=1e-5, rtol=1e-5)

    # check 2: larger image with a small explicit tile -> multi-tile pixel grid
    x2 = jax.random.randint(
        k2, (2, 3, 16, 16), 0, max_value, jnp.int32).astype(jnp.float32)
    out2 = jax.block_until_ready(
        image_bow_embedding(x2, emb_weight, max_value=max_value, tile_hw=128))
    ref2 = _reference(x2, emb_weight, max_value)
    assert out2.shape == (2, embedding_dim, 16, 16)
    assert jnp.allclose(out2, ref2, atol=1e-5, rtol=1e-5)

    print("KERNEL_OK")
</pallas_src>

<mosaic_0001>
module attributes {stable_mosaic.version = 11 : i64} {
  func.func @kernel(%arg0: i32, %arg1: i32, %arg2: memref<1x3x128xf32, #tpu.memory_space<vmem>>, %arg3: memref<128x512xf32, #tpu.memory_space<vmem>>, %arg4: memref<1x128x128xf32, #tpu.memory_space<vmem>>, %arg5: memref<512x128xf32, #tpu.memory_space<vmem>>) attributes {dimension_semantics = [#tpu.dimension_semantics<parallel>, #tpu.dimension_semantics<parallel>], iteration_bounds = array<i64: 2, 1>, scalar_prefetch = 0 : i64, scratch_operands = 1 : i64, tpu.core_type = #tpu.core_type<tc>, window_params = [{transform_indices = @transform_0, window_bounds = array<i64: 1, 3, 128>}, {pipeline_mode = #tpu.pipeline_mode<synchronous>, transform_indices = @transform_1, window_bounds = array<i64: 128, 512>}, {transform_indices = @transform_2, window_bounds = array<i64: 1, 128, 128>}]} {
    %c0 = arith.constant 0 : index
    %c0_0 = arith.constant 0 : index
    %c0_1 = arith.constant 0 : index
    %0 = vector.load %arg2[%c0, %c0_0, %c0_1] : memref<1x3x128xf32, #tpu.memory_space<vmem>>, vector<1x3x128xf32>
    %1 = vector.shape_cast %0 : vector<1x3x128xf32> to vector<3x128xf32>
    %2 = arith.fptosi %1 : vector<3x128xf32> to vector<3x128xi32>
    %3 = tpu.iota {dimensions = array<i32: 0>} : vector<152x128xi32>
    %4 = vector.extract_strided_slice %2 {offsets = [0, 0], sizes = [1, 128], strides = [1, 1]} : vector<3x128xi32> to vector<1x128xi32>
    %5 = vector.broadcast %4 : vector<1x128xi32> to vector<152x128xi32>
    %6 = arith.cmpi eq, %3, %5 : vector<152x128xi32>
    %7 = arith.extui %6 : vector<152x128xi1> to vector<152x128xi32>
    %8 = arith.sitofp %7 : vector<152x128xi32> to vector<152x128xf32>
    %c0_2 = arith.constant 0 : index
    %c0_3 = arith.constant 0 : index
    %9 = vector.load %arg5[%c0_2, %c0_3] : memref<512x128xf32, #tpu.memory_space<vmem>>, vector<152x128xf32>
    tpu.vector_store %arg5[%c0_2, %c0_3], %8 {strides = array<i32>} : memref<512x128xf32, #tpu.memory_space<vmem>>, vector<152x128xf32>,
    %10 = vector.extract_strided_slice %2 {offsets = [1, 0], sizes = [1, 128], strides = [1, 1]} : vector<3x128xi32> to vector<1x128xi32>
    %11 = vector.broadcast %10 : vector<1x128xi32> to vector<152x128xi32>
    %12 = arith.cmpi eq, %3, %11 : vector<152x128xi32>
    %13 = arith.extui %12 : vector<152x128xi1> to vector<152x128xi32>
    %14 = arith.sitofp %13 : vector<152x128xi32> to vector<152x128xf32>
    %c152 = arith.constant 152 : index
    %c0_4 = arith.constant 0 : index
    %15 = vector.load %arg5[%c152, %c0_4] : memref<512x128xf32, #tpu.memory_space<vmem>>, vector<152x128xf32>
    tpu.vector_store %arg5[%c152, %c0_4], %14 {strides = array<i32>} : memref<512x128xf32, #tpu.memory_space<vmem>>, vector<152x128xf32>,
    %16 = vector.extract_strided_slice %2 {offsets = [2, 0], sizes = [1, 128], strides = [1, 1]} : vector<3x128xi32> to vector<1x128xi32>
    %17 = vector.broadcast %16 : vector<1x128xi32> to vector<152x128xi32>
    %18 = arith.cmpi eq, %3, %17 : vector<152x128xi32>
    %19 = arith.extui %18 : vector<152x128xi1> to vector<152x128xi32>
    %20 = arith.sitofp %19 : vector<152x128xi32> to vector<152x128xf32>
    %c304 = arith.constant 304 : index
    %c0_5 = arith.constant 0 : index
    %21 = vector.load %arg5[%c304, %c0_5] : memref<512x128xf32, #tpu.memory_space<vmem>>, vector<152x128xf32>
    tpu.vector_store %arg5[%c304, %c0_5], %20 {strides = array<i32>} : memref<512x128xf32, #tpu.memory_space<vmem>>, vector<152x128xf32>,
    %cst = arith.constant 0.000000e+00 : f32
    %22 = vector.broadcast %cst : f32 to vector<56x128xf32>
    %c456 = arith.constant 456 : index
    %c0_6 = arith.constant 0 : index
    %23 = vector.load %arg5[%c456, %c0_6] : memref<512x128xf32, #tpu.memory_space<vmem>>, vector<56x128xf32>
    tpu.vector_store %arg5[%c456, %c0_6], %22 {strides = array<i32>} : memref<512x128xf32, #tpu.memory_space<vmem>>, vector<56x128xf32>,
    %c0_7 = arith.constant 0 : index
    %c0_8 = arith.constant 0 : index
    %24 = vector.load %arg3[%c0_7, %c0_8] : memref<128x512xf32, #tpu.memory_space<vmem>>, vector<128x512xf32>
    %c0_9 = arith.constant 0 : index
    %c0_10 = arith.constant 0 : index
    %25 = vector.load %arg5[%c0_9, %c0_10] : memref<512x128xf32, #tpu.memory_space<vmem>>, vector<512x128xf32>
    %cst_11 = arith.constant dense<0.000000e+00> : vector<128x128xf32>
    %26 = tpu.matmul %24, %25, %cst_11 {dimension_numbers = #tpu.dot_dimension_numbers<[1], [0], [0], [1], [0, 0, 1, 1], [], []>} : vector<128x512xf32>, vector<512x128xf32>, vector<128x128xf32> -> vector<128x128xf32>
    %c0_12 = arith.constant 0 : index
    %c0_13 = arith.constant 0 : index
    %c0_14 = arith.constant 0 : index
    %27 = vector.load %arg4[%c0_12, %c0_13, %c0_14] : memref<1x128x128xf32, #tpu.memory_space<vmem>>, vector<1x128x128xf32>
    %28 = vector.shape_cast %27 : vector<1x128x128xf32> to vector<128x128xf32>
    %29 = vector.shape_cast %26 : vector<128x128xf32> to vector<1x128x128xf32>
    tpu.vector_store %arg4[%c0_12, %c0_13, %c0_14], %29 {strides = array<i32>} : memref<1x128x128xf32, #tpu.memory_space<vmem>>, vector<1x128x128xf32>,
    return
  }
  func.func @transform_0(%arg0: i32, %arg1: i32) -> (i32, i32, i32) {
    %c0_i32 = arith.constant 0 : i32
    %c0_i32_0 = arith.constant 0 : i32
    return %arg0, %c0_i32, %arg1 : i32, i32, i32
  }
  func.func @transform_1(%arg0: i32, %arg1: i32) -> (i32, i32) {
    %c0_i32 = arith.constant 0 : i32
    %c0_i32_0 = arith.constant 0 : i32
    %c0_i32_1 = arith.constant 0 : i32
    return %c0_i32, %c0_i32_0 : i32, i32
  }
  func.func @transform_2(%arg0: i32, %arg1: i32) -> (i32, i32, i32) {
    %c0_i32 = arith.constant 0 : i32
    %c0_i32_0 = arith.constant 0 : i32
    return %arg0, %c0_i32, %arg1 : i32, i32, i32
  }
}

</mosaic_0001>

<llo_original>
// kernel: image_bow_embedding.1
$region0: #{image_bow_embedding.1}
  #allocation0 [shape = 'u32[]', space=smem, size = 0x4, offset = 0x4, fixed_abs, tag = 'smem constant byte address 0x4 - core index']
  #allocation1 [shape = 'u32[144,128]{1,0:T(1,128)}', space=vmem, size = 0x12000, scoped, tag = 'internal scratch']
  #allocation2 [shape = 'f32[512,128]{1,0:T(8,128)}', space=vmem, size = 0x40000, scoped, tag = 'scratch operand']
  %s0 = inlined_call_operand.vmem [shape: f32[2,3,128], index: 0, kind: input, shape index: {}]
  %s1 = inlined_call_operand.vmem [shape: f32[128,512], index: 1, kind: input, shape index: {}]
  %s2 = inlined_call_operand.vmem [shape: f32[2,128,128], index: 2, kind: output, shape index: {}]
  %s3 = sld [smem:[#allocation0]]
  $region41: #{image_bow_embedding.1} parent=0
    _
  %s5 = ssub.s32 1, %s3
  %s6 = scalar_select 0, %s5, %s3
  loop: start=0, step=1, limit=4
  $region2: #{image_bow_embedding.1} parent=0 // loop_pre_header
    _
  $region3: #{image_bow_embedding.1} parent=0 // loop_header
    %s8 = sphi 0, %s12
    %p9 = scmp.ge.s32.totalorder %s8, 4
    %s15 = sphi 0, %s27
    %s16 = sphi 0, %s23
    %s17 = sphi 0, %s15
    %s18 = sphi 0, %s16
    %s19 = sphi 0, %s17
    %s20 = sphi 0, %s18
    %s32 = sphi 0, %s34
    %s35 = sphi 0, %s32
    %s36 = sphi 0, %s35
    %s52 = sphi 0, %s36
    %s56 = sphi 0, %s56
    %s58 = sphi 0, %s56
    %s59 = sphi 0, %s58
    %s73 = sphi 0, %s59
    %s81 = sphi 0, %s83
    %s84 = sphi 0, %s81
    %s85 = sphi 0, %s84
    %s101 = sphi 0, %s85
  $region4: #{image_bow_embedding.1} parent=0 // loop_header_branch
    %11 = sbr.rel (%p9) target = $region8
  $region5: #{image_bow_embedding.1} parent=0 // loop_body
    %s13 = ssub.s32 %s8, 1
    %s14 = ssub.s32 %s8, 2
    %s21 = sadd.s32 1, %s16
    %p22 = scmp.ge.s32.totalorder %s21, 1
    %s23 = scalar_select %p22, 0, %s21
    %s24 = sadd.s32 1, %s15
    %s25 = scalar_select %p22, %s24, %s15
    %p26 = scmp.ge.s32.totalorder %s25, 2
    %s27 = scalar_select %p26, 0, %s25
    %s28 = ssub.s32 %s15, %s27
    %s29 = ssub.s32 %s16, %s23
    %s30 = sor.u32 %s28, %s29
    %p31 = scmp.eq.s32.totalorder %s30, 0
    %s33 = sadd.s32 %s32, 1
    %s34 = scalar_select %p31, %s32, %s33
    %p37 = pneg %p31
    %p38 = scmp.eq.s32.totalorder %s8, 1
    %p39 = por %p37, %p38
    %p40 = scmp.ne.s32.totalorder %s32, %s35
    %p41 = scmp.eq.s32.totalorder %s8, 0
    %p42 = por %p40, %p41
    %p43 = scmp.ne.s32.totalorder %s32, %s35
    %p44 = scmp.eq.s32.totalorder %s13, 1
    %p45 = por %p43, %p44
    %p46 = scmp.ne.s32.totalorder %s35, %s36
    %p47 = scmp.eq.s32.totalorder %s13, 0
    %p48 = por %p46, %p47
    %p49 = scmp.ne.s32.totalorder %s35, %s36
    %p50 = scmp.eq.s32.totalorder %s14, 1
    %p51 = por %p49, %p50
    %p53 = scmp.ne.s32.totalorder %s36, %s52
    %p54 = scmp.eq.s32.totalorder %s14, 0
    %p55 = por %p53, %p54
    %s57 = sadd.s32 %s56, 1
    %p60 = scmp.eq.s32.totalorder %s8, 1
    %p61 = scmp.ne.s32.totalorder %s56, %s58
    %p62 = scmp.eq.s32.totalorder %s8, 0
    %p63 = por %p61, %p62
    %p64 = scmp.ne.s32.totalorder %s56, %s58
    %p65 = scmp.eq.s32.totalorder %s13, 1
    %p66 = por %p64, %p65
    %p67 = scmp.ne.s32.totalorder %s58, %s59
    %p68 = scmp.eq.s32.totalorder %s13, 0
    %p69 = por %p67, %p68
    %p70 = scmp.ne.s32.totalorder %s58, %s59
    %p71 = scmp.eq.s32.totalorder %s14, 1
    %p72 = por %p70, %p71
    %p74 = scmp.ne.s32.totalorder %s59, %s73
    %p75 = scmp.eq.s32.totalorder %s14, 0
    %p76 = por %p74, %p75
    %s77 = ssub.s32 %s15, %s27
    %s78 = ssub.s32 %s16, %s23
    %s79 = sor.u32 %s77, %s78
    %p80 = scmp.eq.s32.totalorder %s79, 0
    %s82 = sadd.s32 %s81, 1
    %s83 = scalar_select %p80, %s81, %s82
    %p86 = pneg %p80
    %p87 = scmp.eq.s32.totalorder %s8, 1
    %p88 = por %p86, %p87
    %p89 = scmp.ne.s32.totalorder %s81, %s84
    %p90 = scmp.eq.s32.totalorder %s8, 0
    %p91 = por %p89, %p90
    %p92 = scmp.ne.s32.totalorder %s81, %s84
    %p93 = scmp.eq.s32.totalorder %s13, 1
    %p94 = por %p92, %p93
    %p95 = scmp.ne.s32.totalorder %s84, %s85
    %p96 = scmp.eq.s32.totalorder %s13, 0
    %p97 = por %p95, %p96
    %p98 = scmp.ne.s32.totalorder %s84, %s85
    %p99 = scmp.eq.s32.totalorder %s14, 1
    %p100 = por %p98, %p99
    %p102 = scmp.ne.s32.totalorder %s85, %s101
    %p103 = scmp.eq.s32.totalorder %s14, 0
    %p104 = por %p102, %p103
    %p105 = scmp.le.s32.totalorder 1, %s8
    %p106 = scmp.lt.s32.totalorder %s8, 3
    %p107 = pnand %p105, %p106
    %p108 = pneg %p107
    // Predicated region
    $region9: #{image_bow_embedding.1} parent=5 // pred_check
      _
    $region10: #{image_bow_embedding.1} parent=5 // pred_check_branch
      %110 = sbr.rel (%p107) target = $region12
    $region11: #{image_bow_embedding.1} parent=5 // pred_region
      %s111 = ssub.s32 %s8, 1
      // Predicated region
      $region13: #{image_bow_embedding.1} parent=11 // pred_check
        %p112 = pneg %p69
      $region14: #{image_bow_embedding.1} parent=11 // pred_check_branch
        %114 = sbr.rel (%p112) target = $region16
      $region15: #{image_bow_embedding.1} parent=11 // pred_region
        _
      $region16: #{image_bow_embedding.1} parent=11 // pred_fallthru
        _
    $region12: #{image_bow_embedding.1} parent=5 // pred_fallthru
      _
    %p115 = scmp.lt.s32.totalorder %s8, 2
    // Predicated region
    $region17: #{image_bow_embedding.1} parent=5 // pred_check
      %p116 = pneg %p115
    $region18: #{image_bow_embedding.1} parent=5 // pred_check_branch
      %118 = sbr.rel (%p116) target = $region20
    $region19: #{image_bow_embedding.1} parent=5 // pred_region
      // Predicated region
      $region21: #{image_bow_embedding.1} parent=19 // pred_check
        %p119 = pneg %p42
      $region22: #{image_bow_embedding.1} parent=19 // pred_check_branch
        %121 = sbr.rel (%p119) target = $region24
      $region23: #{image_bow_embedding.1} parent=19 // pred_region
        %p122 = scmp.lt.s32.totalorder %s15, 1
        %s123 = scalar_select %p122, %s15, 1
        %p124 = scmp.lt.s32.totalorder %s16, 0
        %s125 = scalar_select %p124, %s16, 0
        %s126 = sadd.s32 %s125, %s123
        %s127 = smul.addr %s126, 4
        %s128 = scalar_lea.vmem %s0, %s127
      $region24: #{image_bow_embedding.1} parent=19 // pred_fallthru
        _
    $region20: #{image_bow_embedding.1} parent=5 // pred_fallthru
      _
    %p129 = scmp.le.s32.totalorder 1, %s8
    %p130 = scmp.lt.s32.totalorder %s8, 3
    %p131 = pnand %p129, %p130
    %p132 = pneg %p131
    // Predicated region
    $region25: #{image_bow_embedding.1} parent=5 // pred_check
      _
    $region26: #{image_bow_embedding.1} parent=5 // pred_check_branch
      %134 = sbr.rel (%p131) target = $region28
    $region27: #{image_bow_embedding.1} parent=5 // pred_region
      %s135 = ssub.s32 %s8, 1
      %p136 = scmp.lt.s32.totalorder %s17, 1
      %s137 = scalar_select %p136, %s17, 1
      %p138 = scmp.lt.s32.totalorder %s18, 0
      %s139 = scalar_select %p138, %s18, 0
      %s140 = sadd.s32 %s139, %s137
      %s141 = smul.addr %s140, 4
      %s142 = scalar_lea.vmem %s0, %s141
      %p143 = pneg %p48
      %p144 = pneg %p45
      %p145 = pneg %p69
      %p146 = pneg %p66
      %p147 = pneg %p97
      %p148 = pneg %p94
      %p149 = scmp.lt.s32.totalorder %s17, 1
      %s150 = scalar_select %p149, %s17, 1
      %p151 = scmp.lt.s32.totalorder %s18, 0
      %s152 = scalar_select %p151, %s18, 0
      %s153 = smul.addr %s150, 16
      %s154 = sadd.s32 %s152, %s153
      %s155 = smul.addr %s154, 8
      %s156 = scalar_lea.vmem %s2, %s155
      %p157 = scmp.lt.s32.totalorder %s17, 1
      %s158 = scalar_select %p157, %s17, 1
      %p159 = scmp.lt.s32.totalorder %s18, 0
      %s160 = scalar_select %p159, %s18, 0
      %s161 = sadd.s32 %s160, %s158
      %s162 = smul.addr %s161, 4
      %s163 = scalar_lea.vmem %s0, %s162
      %p164 = scmp.lt.s32.totalorder %s17, 1
      %s165 = scalar_select %p164, %s17, 1
      %p166 = scmp.lt.s32.totalorder %s18, 0
      %s167 = scalar_select %p166, %s18, 0
      %s168 = smul.addr %s165, 16
      %s169 = sadd.s32 %s167, %s168
      %s170 = smul.addr %s169, 8
      %s171 = scalar_lea.vmem %s2, %s170
      %v172 = vld [vmem:[%s163] sm:$0x7]
      %v173 = vcvt.f32.s32.to.zero.pseudo %v172
      %v174 = vlaneseq
      %v175 = vshrl.u32 %v174, 7
      %v176 = vadd.s32 %v175, 8
      %v177 = vadd.s32 %v175, 16
      %v178 = vadd.s32 %v175, 24
      %v179 = vadd.s32 %v175, 32
      %v180 = vadd.s32 %v175, 40
      %v181 = vadd.s32 %v175, 48
      %v182 = vadd.s32 %v175, 56
      %v183 = vadd.s32 %v175, 64
      %v184 = vadd.s32 %v175, 72
      %v185 = vadd.s32 %v175, 80
      %v186 = vadd.s32 %v175, 88
      %v187 = vadd.s32 %v175, 96
      %v188 = vadd.s32 %v175, 104
      %v189 = vadd.s32 %v175, 112
      %v190 = vadd.s32 %v175, 120
      %v191 = vadd.s32 %v175, 128
      %v192 = vadd.s32 %v175, 136
      %v193 = vadd.s32 %v175, 144
      %v194 = vlaneseq
      %v195 = vshrl.u32 %v194, 7
      %v196 = vsub.s32 0, %v195
      %v197 = vrot.slane %v173, %v196
      %vm198 = vcmp.eq.s32.totalorder %v175, %v197
      %vm199 = vcmp.eq.s32.totalorder %v176, %v197
      %vm200 = vcmp.eq.s32.totalorder %v177, %v197
      %vm201 = vcmp.eq.s32.totalorder %v178, %v197
      %vm202 = vcmp.eq.s32.totalorder %v179, %v197
      %vm203 = vcmp.eq.s32.totalorder %v180, %v197
      %vm204 = vcmp.eq.s32.totalorder %v181, %v197
      %vm205 = vcmp.eq.s32.totalorder %v182, %v197
      %vm206 = vcmp.eq.s32.totalorder %v183, %v197
      %vm207 = vcmp.eq.s32.totalorder %v184, %v197
      %vm208 = vcmp.eq.s32.totalorder %v185, %v197
      %vm209 = vcmp.eq.s32.totalorder %v186, %v197
      %vm210 = vcmp.eq.s32.totalorder %v187, %v197
      %vm211 = vcmp.eq.s32.totalorder %v188, %v197
      %vm212 = vcmp.eq.s32.totalorder %v189, %v197
      %vm213 = vcmp.eq.s32.totalorder %v190, %v197
      %vm214 = vcmp.eq.s32.totalorder %v191, %v197
      %vm215 = vcmp.eq.s32.totalorder %v192, %v197
      %vm216 = vcmp.eq.s32.totalorder %v193, %v197
      %v217 = vsel %vm198, 1, 0
      %v218 = vsel %vm199, 1, 0
      %v219 = vsel %vm200, 1, 0
      %v220 = vsel %vm201, 1, 0
      %v221 = vsel %vm202, 1, 0
      %v222 = vsel %vm203, 1, 0
      %v223 = vsel %vm204, 1, 0
      %v224 = vsel %vm205, 1, 0
      %v225 = vsel %vm206, 1, 0
      %v226 = vsel %vm207, 1, 0
      %v227 = vsel %vm208, 1, 0
      %v228 = vsel %vm209, 1, 0
      %v229 = vsel %vm210, 1, 0
      %v230 = vsel %vm211, 1, 0
      %v231 = vsel %vm212, 1, 0
      %v232 = vsel %vm213, 1, 0
      %v233 = vsel %vm214, 1, 0
      %v234 = vsel %vm215, 1, 0
      %v235 = vsel %vm216, 1, 0
      %v236 = vcvt.s32.f32 %v217
      %v237 = vcvt.s32.f32 %v218
      %v238 = vcvt.s32.f32 %v219
      %v239 = vcvt.s32.f32 %v220
      %v240 = vcvt.s32.f32 %v221
      %v241 = vcvt.s32.f32 %v222
      %v242 = vcvt.s32.f32 %v223
      %v243 = vcvt.s32.f32 %v224
      %v244 = vcvt.s32.f32 %v225
      %v245 = vcvt.s32.f32 %v226
      %v246 = vcvt.s32.f32 %v227
      %v247 = vcvt.s32.f32 %v228
      %v248 = vcvt.s32.f32 %v229
      %v249 = vcvt.s32.f32 %v230
      %v250 = vcvt.s32.f32 %v231
      %v251 = vcvt.s32.f32 %v232
      %v252 = vcvt.s32.f32 %v233
      %v253 = vcvt.s32.f32 %v234
      %v254 = vcvt.s32.f32 %v235
      %255 = vst [vmem:[#allocation2] sm:$0xff] %v236
      %256 = vst [vmem:[#allocation2 + $0x8] sm:$0xff] %v237
      %257 = vst [vmem:[#allocation2 + $0x10] sm:$0xff] %v238
      %258 = vst [vmem:[#allocation2 + $0x18] sm:$0xff] %v239
      %259 = vst [vmem:[#allocation2 + $0x20] sm:$0xff] %v240
      %260 = vst [vmem:[#allocation2 + $0x28] sm:$0xff] %v241
      %261 = vst [vmem:[#allocation2 + $0x30] sm:$0xff] %v242
      %262 = vst [vmem:[#allocation2 + $0x38] sm:$0xff] %v243
      %263 = vst [vmem:[#allocation2 + $0x40] sm:$0xff] %v244
      %264 = vst [vmem:[#allocation2 + $0x48] sm:$0xff] %v245
      %265 = vst [vmem:[#allocation2 + $0x50] sm:$0xff] %v246
      %266 = vst [vmem:[#allocation2 + $0x58] sm:$0xff] %v247
      %267 = vst [vmem:[#allocation2 + $0x60] sm:$0xff] %v248
      %268 = vst [vmem:[#allocation2 + $0x68] sm:$0xff] %v249
      %269 = vst [vmem:[#allocation2 + $0x70] sm:$0xff] %v250
      %270 = vst [vmem:[#allocation2 + $0x78] sm:$0xff] %v251
      %271 = vst [vmem:[#allocation2 + $0x80] sm:$0xff] %v252
      %272 = vst [vmem:[#allocation2 + $0x88] sm:$0xff] %v253
      %273 = vst [vmem:[#allocation2 + $0x90] sm:$0xff] %v254
      %v274 = vlaneseq
      %v275 = vshrl.u32 %v274, 7
      %v276 = vsub.s32 1, %v275
      %v277 = vrot.slane %v173, %v276
      %vm278 = vcmp.eq.s32.totalorder %v175, %v277
      %vm279 = vcmp.eq.s32.totalorder %v176, %v277
      %vm280 = vcmp.eq.s32.totalorder %v177, %v277
      %vm281 = vcmp.eq.s32.totalorder %v178, %v277
      %vm282 = vcmp.eq.s32.totalorder %v179, %v277
      %vm283 = vcmp.eq.s32.totalorder %v180, %v277
      %vm284 = vcmp.eq.s32.totalorder %v181, %v277
      %vm285 = vcmp.eq.s32.totalorder %v182, %v277
      %vm286 = vcmp.eq.s32.totalorder %v183, %v277
      %vm287 = vcmp.eq.s32.totalorder %v184, %v277
      %vm288 = vcmp.eq.s32.totalorder %v185, %v277
      %vm289 = vcmp.eq.s32.totalorder %v186, %v277
      %vm290 = vcmp.eq.s32.totalorder %v187, %v277
      %vm291 = vcmp.eq.s32.totalorder %v188, %v277
      %vm292 = vcmp.eq.s32.totalorder %v189, %v277
      %vm293 = vcmp.eq.s32.totalorder %v190, %v277
      %vm294 = vcmp.eq.s32.totalorder %v191, %v277
      %vm295 = vcmp.eq.s32.totalorder %v192, %v277
      %vm296 = vcmp.eq.s32.totalorder %v193, %v277
      %v297 = vsel %vm278, 1, 0
      %v298 = vsel %vm279, 1, 0
      %v299 = vsel %vm280, 1, 0
      %v300 = vsel %vm281, 1, 0
      %v301 = vsel %vm282, 1, 0
      %v302 = vsel %vm283, 1, 0
      %v303 = vsel %vm284, 1, 0
      %v304 = vsel %vm285, 1, 0
      %v305 = vsel %vm286, 1, 0
      %v306 = vsel %vm287, 1, 0
      %v307 = vsel %vm288, 1, 0
      %v308 = vsel %vm289, 1, 0
      %v309 = vsel %vm290, 1, 0
      %v310 = vsel %vm291, 1, 0
      %v311 = vsel %vm292, 1, 0
      %v312 = vsel %vm293, 1, 0
      %v313 = vsel %vm294, 1, 0
      %v314 = vsel %vm295, 1, 0
      %v315 = vsel %vm296, 1, 0
      %v316 = vcvt.s32.f32 %v297
      %v317 = vcvt.s32.f32 %v298
      %v318 = vcvt.s32.f32 %v299
      %v319 = vcvt.s32.f32 %v300
      %v320 = vcvt.s32.f32 %v301
      %v321 = vcvt.s32.f32 %v302
      %v322 = vcvt.s32.f32 %v303
      %v323 = vcvt.s32.f32 %v304
      %v324 = vcvt.s32.f32 %v305
      %v325 = vcvt.s32.f32 %v306
      %v326 = vcvt.s32.f32 %v307
      %v327 = vcvt.s32.f32 %v308
      %v328 = vcvt.s32.f32 %v309
      %v329 = vcvt.s32.f32 %v310
      %v330 = vcvt.s32.f32 %v311
      %v331 = vcvt.s32.f32 %v312
      %v332 = vcvt.s32.f32 %v313
      %v333 = vcvt.s32.f32 %v314
      %v334 = vcvt.s32.f32 %v315
      %335 = vst [vmem:[#allocation2 + $0x98] sm:$0xff] %v316
      %336 = vst [vmem:[#allocation2 + $0xa0] sm:$0xff] %v317
      %337 = vst [vmem:[#allocation2 + $0xa8] sm:$0xff] %v318
      %338 = vst [vmem:[#allocation2 + $0xb0] sm:$0xff] %v319
      %339 = vst [vmem:[#allocation2 + $0xb8] sm:$0xff] %v320
      %340 = vst [vmem:[#allocation2 + $0xc0] sm:$0xff] %v321
      %341 = vst [vmem:[#allocation2 + $0xc8] sm:$0xff] %v322
      %342 = vst [vmem:[#allocation2 + $0xd0] sm:$0xff] %v323
      %343 = vst [vmem:[#allocation2 + $0xd8] sm:$0xff] %v324
      %344 = vst [vmem:[#allocation2 + $0xe0] sm:$0xff] %v325
      %345 = vst [vmem:[#allocation2 + $0xe8] sm:$0xff] %v326
      %346 = vst [vmem:[#allocation2 + $0xf0] sm:$0xff] %v327
      %347 = vst [vmem:[#allocation2 + $0xf8] sm:$0xff] %v328
      %348 = vst [vmem:[#allocation2 + $0x100] sm:$0xff] %v329
      %349 = vst [vmem:[#allocation2 + $0x108] sm:$0xff] %v330
      %350 = vst [vmem:[#allocation2 + $0x110] sm:$0xff] %v331
      %351 = vst [vmem:[#allocation2 + $0x118] sm:$0xff] %v332
      %352 = vst [vmem:[#allocation2 + $0x120] sm:$0xff] %v333
      %353 = vst [vmem:[#allocation2 + $0x128] sm:$0xff] %v334
      %v354 = vlaneseq
      %v355 = vshrl.u32 %v354, 7
      %v356 = vsub.s32 2, %v355
      %v357 = vrot.slane %v173, %v356
      %vm358 = vcmp.eq.s32.totalorder %v175, %v357
      %vm359 = vcmp.eq.s32.totalorder %v176, %v357
      %vm360 = vcmp.eq.s32.totalorder %v177, %v357
      %vm361 = vcmp.eq.s32.totalorder %v178, %v357
      %vm362 = vcmp.eq.s32.totalorder %v179, %v357
      %vm363 = vcmp.eq.s32.totalorder %v180, %v357
      %vm364 = vcmp.eq.s32.totalorder %v181, %v357
      %vm365 = vcmp.eq.s32.totalorder %v182, %v357
      %vm366 = vcmp.eq.s32.totalorder %v183, %v357
      %vm367 = vcmp.eq.s32.totalorder %v184, %v357
      %vm368 = vcmp.eq.s32.totalorder %v185, %v357
      %vm369 = vcmp.eq.s32.totalorder %v186, %v357
      %vm370 = vcmp.eq.s32.totalorder %v187, %v357
      %vm371 = vcmp.eq.s32.totalorder %v188, %v357
      %vm372 = vcmp.eq.s32.totalorder %v189, %v357
      %vm373 = vcmp.eq.s32.totalorder %v190, %v357
      %vm374 = vcmp.eq.s32.totalorder %v191, %v357
      %vm375 = vcmp.eq.s32.totalorder %v192, %v357
      %vm376 = vcmp.eq.s32.totalorder %v193, %v357
      %v377 = vsel %vm358, 1, 0
      %v378 = vsel %vm359, 1, 0
      %v379 = vsel %vm360, 1, 0
      %v380 = vsel %vm361, 1, 0
      %v381 = vsel %vm362, 1, 0
      %v382 = vsel %vm363, 1, 0
      %v383 = vsel %vm364, 1, 0
      %v384 = vsel %vm365, 1, 0
      %v385 = vsel %vm366, 1, 0
      %v386 = vsel %vm367, 1, 0
      %v387 = vsel %vm368, 1, 0
      %v388 = vsel %vm369, 1, 0
      %v389 = vsel %vm370, 1, 0
      %v390 = vsel %vm371, 1, 0
      %v391 = vsel %vm372, 1, 0
      %v392 = vsel %vm373, 1, 0
      %v393 = vsel %vm374, 1, 0
      %v394 = vsel %vm375, 1, 0
      %v395 = vsel %vm376, 1, 0
      %v396 = vcvt.s32.f32 %v377
      %v397 = vcvt.s32.f32 %v378
      %v398 = vcvt.s32.f32 %v379
      %v399 = vcvt.s32.f32 %v380
      %v400 = vcvt.s32.f32 %v381
      %v401 = vcvt.s32.f32 %v382
      %v402 = vcvt.s32.f32 %v383
      %v403 = vcvt.s32.f32 %v384
      %v404 = vcvt.s32.f32 %v385
      %v405 = vcvt.s32.f32 %v386
      %v406 = vcvt.s32.f32 %v387
      %v407 = vcvt.s32.f32 %v388
      %v408 = vcvt.s32.f32 %v389
      %v409 = vcvt.s32.f32 %v390
      %v410 = vcvt.s32.f32 %v391
      %v411 = vcvt.s32.f32 %v392
      %v412 = vcvt.s32.f32 %v393
      %v413 = vcvt.s32.f32 %v394
      %v414 = vcvt.s32.f32 %v395
      %415 = vst [vmem:[#allocation2 + $0x130] sm:$0xff] %v396
      %416 = vst [vmem:[#allocation2 + $0x138] sm:$0xff] %v397
      %417 = vst [vmem:[#allocation2 + $0x140] sm:$0xff] %v398
      %418 = vst [vmem:[#allocation2 + $0x148] sm:$0xff] %v399
      %419 = vst [vmem:[#allocation2 + $0x150] sm:$0xff] %v400
      %420 = vst [vmem:[#allocation2 + $0x158] sm:$0xff] %v401
      %421 = vst [vmem:[#allocation2 + $0x160] sm:$0xff] %v402
      %422 = vst [vmem:[#allocation2 + $0x168] sm:$0xff] %v403
      %423 = vst [vmem:[#allocation2 + $0x170] sm:$0xff] %v404
      %424 = vst [vmem:[#allocation2 + $0x178] sm:$0xff] %v405
      %425 = vst [vmem:[#allocation2 + $0x180] sm:$0xff] %v406
      %426 = vst [vmem:[#allocation2 + $0x188] sm:$0xff] %v407
      %427 = vst [vmem:[#allocation2 + $0x190] sm:$0xff] %v408
      %428 = vst [vmem:[#allocation2 + $0x198] sm:$0xff] %v409
      %429 = vst [vmem:[#allocation2 + $0x1a0] sm:$0xff] %v410
      %430 = vst [vmem:[#allocation2 + $0x1a8] sm:$0xff] %v411
      %431 = vst [vmem:[#allocation2 + $0x1b0] sm:$0xff] %v412
      %432 = vst [vmem:[#allocation2 + $0x1b8] sm:$0xff] %v413
      %433 = vst [vmem:[#allocation2 + $0x1c0] sm:$0xff] %v414
      %434 = vst [vmem:[#allocation2 + $0x1c8] sm:$0xff] 0.0
      %435 = vst [vmem:[#allocation2 + $0x1d0] sm:$0xff] 0.0
      %436 = vst [vmem:[#allocation2 + $0x1d8] sm:$0xff] 0.0
      %437 = vst [vmem:[#allocation2 + $0x1e0] sm:$0xff] 0.0
      %438 = vst [vmem:[#allocation2 + $0x1e8] sm:$0xff] 0.0
      %439 = vst [vmem:[#allocation2 + $0x1f0] sm:$0xff] 0.0
      %440 = vst [vmem:[#allocation2 + $0x1f8] sm:$0xff] 0.0
      %v441 = vld [vmem:[%s1] sm:$0xff]
      %v442 = vld [vmem:[%s1 + $0x8] sm:$0xff]
      %v443 = vld [vmem:[%s1 + $0x10] sm:$0xff]
      %v444 = vld [vmem:[%s1 + $0x18] sm:$0xff]
      %v445 = vld [vmem:[%s1 + $0x20] sm:$0xff]
      %v446 = vld [vmem:[%s1 + $0x28] sm:$0xff]
      %v447 = vld [vmem:[%s1 + $0x30] sm:$0xff]
      %v448 = vld [vmem:[%s1 + $0x38] sm:$0xff]
      %v449 = vld [vmem:[%s1 + $0x40] sm:$0xff]
      %v450 = vld [vmem:[%s1 + $0x48] sm:$0xff]
      %v451 = vld [vmem:[%s1 + $0x50] sm:$0xff]
      %v452 = vld [vmem:[%s1 + $0x58] sm:$0xff]
      %v453 = vld [vmem:[%s1 + $0x60] sm:$0xff]
      %v454 = vld [vmem:[%s1 + $0x68] sm:$0xff]
      %v455 = vld [vmem:[%s1 + $0x70] sm:$0xff]
      %v456 = vld [vmem:[%s1 + $0x78] sm:$0xff]
      %v457 = vld [vmem:[%s1 + $0x80] sm:$0xff]
      %v458 = vld [vmem:[%s1 + $0x88] sm:$0xff]
      %v459 = vld [vmem:[%s1 + $0x90] sm:$0xff]
      %v460 = vld [vmem:[%s1 + $0x98] sm:$0xff]
      %v461 = vld [vmem:[%s1 + $0xa0] sm:$0xff]
      %v462 = vld [vmem:[%s1 + $0xa8] sm:$0xff]
      %v463 = vld [vmem:[%s1 + $0xb0] sm:$0xff]
      %v464 = vld [vmem:[%s1 + $0xb8] sm:$0xff]
      %v465 = vld [vmem:[%s1 + $0xc0] sm:$0xff]
      %v466 = vld [vmem:[%s1 + $0xc8] sm:$0xff]
      %v467 = vld [vmem:[%s1 + $0xd0] sm:$0xff]
      %v468 = vld [vmem:[%s1 + $0xd8] sm:$0xff]
      %v469 = vld [vmem:[%s1 + $0xe0] sm:$0xff]
      %v470 = vld [vmem:[%s1 + $0xe8] sm:$0xff]
      %v471 = vld [vmem:[%s1 + $0xf0] sm:$0xff]
      %v472 = vld [vmem:[%s1 + $0xf8] sm:$0xff]
      %v473 = vld [vmem:[%s1 + $0x100] sm:$0xff]
      %v474 = vld [vmem:[%s1 + $0x108] sm:$0xff]
      %v475 = vld [vmem:[%s1 + $0x110] sm:$0xff]
      %v476 = vld [vmem:[%s1 + $0x118] sm:$0xff]
      %v477 = vld [vmem:[%s1 + $0x120] sm:$0xff]
      %v478 = vld [vmem:[%s1 + $0x128] sm:$0xff]
      %v479 = vld [vmem:[%s1 + $0x130] sm:$0xff]
      %v480 = vld [vmem:[%s1 + $0x138] sm:$0xff]
      %v481 = vld [vmem:[%s1 + $0x140] sm:$0xff]
      %v482 = vld [vmem:[%s1 + $0x148] sm:$0xff]
      %v483 = vld [vmem:[%s1 + $0x150] sm:$0xff]
      %v484 = vld [vmem:[%s1 + $0x158] sm:$0xff]
      %v485 = vld [vmem:[%s1 + $0x160] sm:$0xff]
      %v486 = vld [vmem:[%s1 + $0x168] sm:$0xff]
      %v487 = vld [vmem:[%s1 + $0x170] sm:$0xff]
      %v488 = vld [vmem:[%s1 + $0x178] sm:$0xff]
      %v489 = vld [vmem:[%s1 + $0x180] sm:$0xff]
      %v490 = vld [vmem:[%s1 + $0x188] sm:$0xff]
      %v491 = vld [vmem:[%s1 + $0x190] sm:$0xff]
      %v492 = vld [vmem:[%s1 + $0x198] sm:$0xff]
      %v493 = vld [vmem:[%s1 + $0x1a0] sm:$0xff]
      %v494 = vld [vmem:[%s1 + $0x1a8] sm:$0xff]
      %v495 = vld [vmem:[%s1 + $0x1b0] sm:$0xff]
      %v496 = vld [vmem:[%s1 + $0x1b8] sm:$0xff]
      %v497 = vld [vmem:[%s1 + $0x1c0] sm:$0xff]
      %v498 = vld [vmem:[%s1 + $0x1c8] sm:$0xff]
      %v499 = vld [vmem:[%s1 + $0x1d0] sm:$0xff]
      %v500 = vld [vmem:[%s1 + $0x1d8] sm:$0xff]
      %v501 = vld [vmem:[%s1 + $0x1e0] sm:$0xff]
      %v502 = vld [vmem:[%s1 + $0x1e8] sm:$0xff]
      %v503 = vld [vmem:[%s1 + $0x1f0] sm:$0xff]
      %v504 = vld [vmem:[%s1 + $0x1f8] sm:$0xff]
      %v505 = vld [vmem:[#allocation2] sm:$0xff]
      %v506 = vld [vmem:[#allocation2 + $0x8] sm:$0xff]
      %v507 = vld [vmem:[#allocation2 + $0x10] sm:$0xff]
      %v508 = vld [vmem:[#allocation2 + $0x18] sm:$0xff]
      %v509 = vld [vmem:[#allocation2 + $0x20] sm:$0xff]
      %v510 = vld [vmem:[#allocation2 + $0x28] sm:$0xff]
      %v511 = vld [vmem:[#allocation2 + $0x30] sm:$0xff]
      %v512 = vld [vmem:[#allocation2 + $0x38] sm:$0xff]
      %v513 = vld [vmem:[#allocation2 + $0x40] sm:$0xff]
      %v514 = vld [vmem:[#allocation2 + $0x48] sm:$0xff]
      %v515 = vld [vmem:[#allocation2 + $0x50] sm:$0xff]
      %v516 = vld [vmem:[#allocation2 + $0x58] sm:$0xff]
      %v517 = vld [vmem:[#allocation2 + $0x60] sm:$0xff]
      %v518 = vld [vmem:[#allocation2 + $0x68] sm:$0xff]
      %v519 = vld [vmem:[#allocation2 + $0x70] sm:$0xff]
      %v520 = vld [vmem:[#allocation2 + $0x78] sm:$0xff]
      %v521 = vld [vmem:[#allocation2 + $0x80] sm:$0xff]
      %v522 = vld [vmem:[#allocation2 + $0x88] sm:$0xff]
      %v523 = vld [vmem:[#allocation2 + $0x90] sm:$0xff]
      %v524 = vld [vmem:[#allocation2 + $0x98] sm:$0xff]
      %v525 = vld [vmem:[#allocation2 + $0xa0] sm:$0xff]
      %v526 = vld [vmem:[#allocation2 + $0xa8] sm:$0xff]
      %v527 = vld [vmem:[#allocation2 + $0xb0] sm:$0xff]
      %v528 = vld [vmem:[#allocation2 + $0xb8] sm:$0xff]
      %v529 = vld [vmem:[#allocation2 + $0xc0] sm:$0xff]
      %v530 = vld [vmem:[#allocation2 + $0xc8] sm:$0xff]
      %v531 = vld [vmem:[#allocation2 + $0xd0] sm:$0xff]
      %v532 = vld [vmem:[#allocation2 + $0xd8] sm:$0xff]
      %v533 = vld [vmem:[#allocation2 + $0xe0] sm:$0xff]
      %v534 = vld [vmem:[#allocation2 + $0xe8] sm:$0xff]
      %v535 = vld [vmem:[#allocation2 + $0xf0] sm:$0xff]
      %v536 = vld [vmem:[#allocation2 + $0xf8] sm:$0xff]
      %v537 = vld [vmem:[#allocation2 + $0x100] sm:$0xff]
      %v538 = vld [vmem:[#allocation2 + $0x108] sm:$0xff]
      %v539 = vld [vmem:[#allocation2 + $0x110] sm:$0xff]
      %v540 = vld [vmem:[#allocation2 + $0x118] sm:$0xff]
      %v541 = vld [vmem:[#allocation2 + $0x120] sm:$0xff]
      %v542 = vld [vmem:[#allocation2 + $0x128] sm:$0xff]
      %v543 = vld [vmem:[#allocation2 + $0x130] sm:$0xff]
      %v544 = vld [vmem:[#allocation2 + $0x138] sm:$0xff]
      %v545 = vld [vmem:[#allocation2 + $0x140] sm:$0xff]
      %v546 = vld [vmem:[#allocation2 + $0x148] sm:$0xff]
      %v547 = vld [vmem:[#allocation2 + $0x150] sm:$0xff]
      %v548 = vld [vmem:[#allocation2 + $0x158] sm:$0xff]
      %v549 = vld [vmem:[#allocation2 + $0x160] sm:$0xff]
      %v550 = vld [vmem:[#allocation2 + $0x168] sm:$0xff]
      %v551 = vld [vmem:[#allocation2 + $0x170] sm:$0xff]
      %v552 = vld [vmem:[#allocation2 + $0x178] sm:$0xff]
      %v553 = vld [vmem:[#allocation2 + $0x180] sm:$0xff]
      %v554 = vld [vmem:[#allocation2 + $0x188] sm:$0xff]
      %v555 = vld [vmem:[#allocation2 + $0x190] sm:$0xff]
      %v556 = vld [vmem:[#allocation2 + $0x198] sm:$0xff]
      %v557 = vld [vmem:[#allocation2 + $0x1a0] sm:$0xff]
      %v558 = vld [vmem:[#allocation2 + $0x1a8] sm:$0xff]
      %v559 = vld [vmem:[#allocation2 + $0x1b0] sm:$0xff]
      %v560 = vld [vmem:[#allocation2 + $0x1b8] sm:$0xff]
      %v561 = vld [vmem:[#allocation2 + $0x1c0] sm:$0xff]
      %v562 = vld [vmem:[#allocation2 + $0x1c8] sm:$0xff]
      %v563 = vld [vmem:[#allocation2 + $0x1d0] sm:$0xff]
      %v564 = vld [vmem:[#allocation2 + $0x1d8] sm:$0xff]
      %v565 = vld [vmem:[#allocation2 + $0x1e0] sm:$0xff]
      %v566 = vld [vmem:[#allocation2 + $0x1e8] sm:$0xff]
      %v567 = vld [vmem:[#allocation2 + $0x1f0] sm:$0xff]
      %v568 = vld [vmem:[#allocation2 + $0x1f8] sm:$0xff]
      %569 = vmatprep.subr.mxu0 0.0
      %570 = vmatpush1.msra.mxu0 %v505
      %571 = vmatprep.subr.mxu0 0.0
      %572 = vmatpush1.msra.mxu0 %v506
      %573 = vmatprep.subr.mxu0 0.0
      %574 = vmatpush1.msra.mxu0 %v507
      %575 = vmatprep.subr.mxu0 0.0
      %576 = vmatpush1.msra.mxu0 %v508
      %577 = vmatprep.subr.mxu0 0.0
      %578 = vmatpush1.msra.mxu0 %v509
      %579 = vmatprep.subr.mxu0 0.0
      %580 = vmatpush1.msra.mxu0 %v510
      %581 = vmatprep.subr.mxu0 0.0
      %582 = vmatpush1.msra.mxu0 %v511
      %583 = vmatprep.subr.mxu0 0.0
      %584 = vmatpush1.msra.mxu0 %v512
      %585 = vmatprep.subr.mxu0 0.0
      %586 = vmatpush1.msra.mxu0 %v513
      %587 = vmatprep.subr.mxu0 0.0
      %588 = vmatpush1.msra.mxu0 %v514
      %589 = vmatprep.subr.mxu0 0.0
      %590 = vmatpush1.msra.mxu0 %v515
      %591 = vmatprep.subr.mxu0 0.0
      %592 = vmatpush1.msra.mxu0 %v516
      %593 = vmatprep.subr.mxu0 0.0
      %594 = vmatpush1.msra.mxu0 %v517
      %595 = vmatprep.subr.mxu0 0.0
      %596 = vmatpush1.msra.mxu0 %v518
      %597 = vmatprep.subr.mxu0 0.0
      %598 = vmatpush1.msra.mxu0 %v519
      %599 = vmatprep.subr.mxu0 0.0
      %600 = vmatpush1.msra.mxu0 %v520
      %601 = vmatprep.subr.mxu0 0.0
      %602 = vmatpush1.msra.mxu0 %v521
      %603 = vmatprep.subr.mxu0 0.0
      %604 = vmatpush1.msra.mxu0 %v522
      %605 = vmatprep.subr.mxu0 0.0
      %606 = vmatpush1.msra.mxu0 %v523
      %607 = vmatprep.subr.mxu0 0.0
      %608 = vmatpush1.msra.mxu0 %v524
      %609 = vmatprep.subr.mxu0 0.0
      %610 = vmatpush1.msra.mxu0 %v525
      %611 = vmatprep.subr.mxu0 0.0
      %612 = vmatpush1.msra.mxu0 %v526
      %613 = vmatprep.subr.mxu0 0.0
      %614 = vmatpush1.msra.mxu0 %v527
      %615 = vmatprep.subr.mxu0 0.0
      %616 = vmatpush1.msra.mxu0 %v528
      %617 = vmatprep.subr.mxu0 0.0
      %618 = vmatpush1.msra.mxu0 %v529
      %619 = vmatprep.subr.mxu0 0.0
      %620 = vmatpush1.msra.mxu0 %v530
      %621 = vmatprep.subr.mxu0 0.0
      %622 = vmatpush1.msra.mxu0 %v531
      %623 = vmatprep.subr.mxu0 0.0
      %624 = vmatpush1.msra.mxu0 %v532
      %625 = vmatprep.subr.mxu0 0.0
      %626 = vmatpush1.msra.mxu0 %v533
      %627 = vmatprep.subr.mxu0 0.0
      %628 = vmatpush1.msra.mxu0 %v534
      %629 = vmatprep.subr.mxu0 0.0
      %630 = vmatpush1.msra.mxu0 %v535
      %631 = vmatprep.subr.mxu0 0.0
      %632 = vmatpush1.msra.mxu0 %v536
      %633 = vmatprep.mubr.f32.mxu0 %v442
      %634 = vmatmul.mubr.f32.gmra.mrb[0].mxu0 %v441
      %v635 = vpop.f32.mrb[0].mxu0
      %v636 = vadd.f32 0.0, %v635
      %v637 = vpop.f32.mrb[0].mxu0
      %638 = vmatprep.mubr.f32.mxu0 %v446
      %639 = vmatmul.mubr.f32.gmra.mrb[0].mxu0 %v445
      %v640 = vpop.f32.mrb[0].mxu0
      %v641 = vadd.f32 0.0, %v640
      %v642 = vpop.f32.mrb[0].mxu0
      %643 = vmatprep.mubr.f32.mxu0 %v450
      %644 = vmatmul.mubr.f32.gmra.mrb[0].mxu0 %v449
      %v645 = vpop.f32.mrb[0].mxu0
      %v646 = vadd.f32 0.0, %v645
      %v647 = vpop.f32.mrb[0].mxu0
      %648 = vmatprep.mubr.f32.mxu0 %v454
      %649 = vmatmul.mubr.f32.gmra.mrb[0].mxu0 %v453
      %v650 = vpop.f32.mrb[0].mxu0
      %v651 = vadd.f32 0.0, %v650
      %v652 = vpop.f32.mrb[0].mxu0
      %653 = vmatprep.mubr.f32.mxu0 %v458
      %654 = vmatmul.mubr.f32.gmra.mrb[0].mxu0 %v457
      %v655 = vpop.f32.mrb[0].mxu0
      %v656 = vadd.f32 0.0, %v655
      %v657 = vpop.f32.mrb[0].mxu0
      %658 = vmatprep.mubr.f32.mxu0 %v462
      %659 = vmatmul.mubr.f32.gmra.mrb[0].mxu0 %v461
      %v660 = vpop.f32.mrb[0].mxu0
      %v661 = vadd.f32 0.0, %v660
      %v662 = vpop.f32.mrb[0].mxu0
      %663 = vmatprep.mubr.f32.mxu0 %v466
      %664 = vmatmul.mubr.f32.gmra.mrb[0].mxu0 %v465
      %v665 = vpop.f32.mrb[0].mxu0
      %v666 = vadd.f32 0.0, %v665
      %v667 = vpop.f32.mrb[0].mxu0
      %668 = vmatprep.mubr.f32.mxu0 %v470
      %669 = vmatmul.mubr.f32.gmra.mrb[0].mxu0 %v469
      %v670 = vpop.f32.mrb[0].mxu0
      %v671 = vadd.f32 0.0, %v670
      %v672 = vpop.f32.mrb[0].mxu0
      %673 = vmatprep.mubr.f32.mxu0 %v474
      %674 = vmatmul.mubr.f32.gmra.mrb[0].mxu0 %v473
      %v675 = vpop.f32.mrb[0].mxu0
      %v676 = vadd.f32 0.0, %v675
      %v677 = vpop.f32.mrb[0].mxu0
      %678 = vmatprep.mubr.f32.mxu0 %v478
      %679 = vmatmul.mubr.f32.gmra.mrb[0].mxu0 %v477
      %v680 = vpop.f32.mrb[0].mxu0
      %v681 = vadd.f32 0.0, %v680
      %v682 = vpop.f32.mrb[0].mxu0
      %683 = vmatprep.mubr.f32.mxu0 %v482
      %684 = vmatmul.mubr.f32.gmra.mrb[0].mxu0 %v481
      %v685 = vpop.f32.mrb[0].mxu0
      %v686 = vadd.f32 0.0, %v685
      %v687 = vpop.f32.mrb[0].mxu0
      %688 = vmatprep.mubr.f32.mxu0 %v486
      %689 = vmatmul.mubr.f32.gmra.mrb[0].mxu0 %v485
      %v690 = vpop.f32.mrb[0].mxu0
      %v691 = vadd.f32 0.0, %v690
      %v692 = vpop.f32.mrb[0].mxu0
      %693 = vmatprep.mubr.f32.mxu0 %v490
      %694 = vmatmul.mubr.f32.gmra.mrb[0].mxu0 %v489
      %v695 = vpop.f32.mrb[0].mxu0
      %v696 = vadd.f32 0.0, %v695
      %v697 = vpop.f32.mrb[0].mxu0
      %698 = vmatprep.mubr.f32.mxu0 %v494
      %699 = vmatmul.mubr.f32.gmra.mrb[0].mxu0 %v493
      %v700 = vpop.f32.mrb[0].mxu0
      %v701 = vadd.f32 0.0, %v700
      %v702 = vpop.f32.mrb[0].mxu0
      %703 = vmatprep.mubr.f32.mxu0 %v498
      %704 = vmatmul.mubr.f32.gmra.mrb[0].mxu0 %v497
      %v705 = vpop.f32.mrb[0].mxu0
      %v706 = vadd.f32 0.0, %v705
      %v707 = vpop.f32.mrb[0].mxu0
      %708 = vmatprep.mubr.f32.mxu0 %v502
      %709 = vmatmul.mubr.f32.gmra.mrb[0].mxu0 %v501
      %v710 = vpop.f32.mrb[0].mxu0
      %v711 = vadd.f32 0.0, %v710
      %v712 = vpop.f32.mrb[0].mxu0
      %713 = vdwg.mxu0
      %714 = vmatprep.subr.mxu0 0.0
      %715 = vmatpush1.msra.mxu0 %v537
      %716 = vmatprep.subr.mxu0 0.0
      %717 = vmatpush1.msra.mxu0 %v538
      %718 = vmatprep.subr.mxu0 0.0
      %719 = vmatpush1.msra.mxu0 %v539
      %720 = vmatprep.subr.mxu0 0.0
      %721 = vmatpush1.msra.mxu0 %v540
      %722 = vmatprep.subr.mxu0 0.0
      %723 = vmatpush1.msra.mxu0 %v541
      %724 = vmatprep.subr.mxu0 0.0
      %725 = vmatpush1.msra.mxu0 %v542
      %726 = vmatprep.subr.mxu0 0.0
      %727 = vmatpush1.msra.mxu0 %v543
      %728 = vmatprep.subr.mxu0 0.0
      %729 = vmatpush1.msra.mxu0 %v544
      %730 = vmatprep.subr.mxu0 0.0
      %731 = vmatpush1.msra.mxu0 %v545
      %732 = vmatprep.subr.mxu0 0.0
      %733 = vmatpush1.msra.mxu0 %v546
      %734 = vmatprep.subr.mxu0 0.0
      %735 = vmatpush1.msra.mxu0 %v547
      %736 = vmatprep.subr.mxu0 0.0
      %737 = vmatpush1.msra.mxu0 %v548
      %738 = vmatprep.subr.mxu0 0.0
      %739 = vmatpush1.msra.mxu0 %v549
      %740 = vmatprep.subr.mxu0 0.0
      %741 = vmatpush1.msra.mxu0 %v550
      %742 = vmatprep.subr.mxu0 0.0
      %743 = vmatpush1.msra.mxu0 %v551
      %744 = vmatprep.subr.mxu0 0.0
      %745 = vmatpush1.msra.mxu0 %v552
      %746 = vmatprep.subr.mxu0 0.0
      %747 = vmatpush1.msra.mxu0 %v553
      %748 = vmatprep.subr.mxu0 0.0
      %749 = vmatpush1.msra.mxu0 %v554
      %750 = vmatprep.subr.mxu0 0.0
      %751 = vmatpush1.msra.mxu0 %v555
      %752 = vmatprep.subr.mxu0 0.0
      %753 = vmatpush1.msra.mxu0 %v556
      %754 = vmatprep.subr.mxu0 0.0
      %755 = vmatpush1.msra.mxu0 %v557
      %756 = vmatprep.subr.mxu0 0.0
      %757 = vmatpush1.msra.mxu0 %v558
      %758 = vmatprep.subr.mxu0 0.0
      %759 = vmatpush1.msra.mxu0 %v559
      %760 = vmatprep.subr.mxu0 0.0
      %761 = vmatpush1.msra.mxu0 %v560
      %762 = vmatprep.subr.mxu0 0.0
      %763 = vmatpush1.msra.mxu0 %v561
      %764 = vmatprep.subr.mxu0 0.0
      %765 = vmatpush1.msra.mxu0 %v562
      %766 = vmatprep.subr.mxu0 0.0
      %767 = vmatpush1.msra.mxu0 %v563
      %768 = vmatprep.subr.mxu0 0.0
      %769 = vmatpush1.msra.mxu0 %v564
      %770 = vmatprep.subr.mxu0 0.0
      %771 = vmatpush1.msra.mxu0 %v565
      %772 = vmatprep.subr.mxu0 0.0
      %773 = vmatpush1.msra.mxu0 %v566
      %774 = vmatprep.subr.mxu0 0.0
      %775 = vmatpush1.msra.mxu0 %v567
      %776 = vmatprep.subr.mxu0 0.0
      %777 = vmatpush1.msra.mxu0 %v568
      %778 = vmatprep.mubr.f32.mxu0 %v444
      %779 = vmatmul.mubr.f32.gmra.mrb[0].mxu0 %v443
      %v780 = vpop.f32.mrb[0].mxu0
      %v781 = vadd.f32 %v636, %v780
      %v782 = vpop.f32.mrb[0].mxu0
      %783 = vmatprep.mubr.f32.mxu0 %v448
      %784 = vmatmul.mubr.f32.gmra.mrb[0].mxu0 %v447
      %v785 = vpop.f32.mrb[0].mxu0
      %v786 = vadd.f32 %v641, %v785
      %v787 = vpop.f32.mrb[0].mxu0
      %788 = vmatprep.mubr.f32.mxu0 %v452
      %789 = vmatmul.mubr.f32.gmra.mrb[0].mxu0 %v451
      %v790 = vpop.f32.mrb[0].mxu0
      %v791 = vadd.f32 %v646, %v790
      %v792 = vpop.f32.mrb[0].mxu0
      %793 = vmatprep.mubr.f32.mxu0 %v456
      %794 = vmatmul.mubr.f32.gmra.mrb[0].mxu0 %v455
      %v795 = vpop.f32.mrb[0].mxu0
      %v796 = vadd.f32 %v651, %v795
      %v797 = vpop.f32.mrb[0].mxu0
      %798 = vmatprep.mubr.f32.mxu0 %v460
      %799 = vmatmul.mubr.f32.gmra.mrb[0].mxu0 %v459
      %v800 = vpop.f32.mrb[0].mxu0
      %v801 = vadd.f32 %v656, %v800
      %v802 = vpop.f32.mrb[0].mxu0
      %803 = vmatprep.mubr.f32.mxu0 %v464
      %804 = vmatmul.mubr.f32.gmra.mrb[0].mxu0 %v463
      %v805 = vpop.f32.mrb[0].mxu0
      %v806 = vadd.f32 %v661, %v805
      %v807 = vpop.f32.mrb[0].mxu0
      %808 = vmatprep.mubr.f32.mxu0 %v468
      %809 = vmatmul.mubr.f32.gmra.mrb[0].mxu0 %v467
      %v810 = vpop.f32.mrb[0].mxu0
      %v811 = vadd.f32 %v666, %v810
      %v812 = vpop.f32.mrb[0].mxu0
      %813 = vmatprep.mubr.f32.mxu0 %v472
      %814 = vmatmul.mubr.f32.gmra.mrb[0].mxu0 %v471
      %v815 = vpop.f32.mrb[0].mxu0
      %v816 = vadd.f32 %v671, %v815
      %v817 = vpop.f32.mrb[0].mxu0
      %818 = vmatprep.mubr.f32.mxu0 %v476
      %819 = vmatmul.mubr.f32.gmra.mrb[0].mxu0 %v475
      %v820 = vpop.f32.mrb[0].mxu0
      %v821 = vadd.f32 %v676, %v820
      %v822 = vpop.f32.mrb[0].mxu0
      %823 = vmatprep.mubr.f32.mxu0 %v480
      %824 = vmatmul.mubr.f32.gmra.mrb[0].mxu0 %v479
      %v825 = vpop.f32.mrb[0].mxu0
      %v826 = vadd.f32 %v681, %v825
      %v827 = vpop.f32.mrb[0].mxu0
      %828 = vmatprep.mubr.f32.mxu0 %v484
      %829 = vmatmul.mubr.f32.gmra.mrb[0].mxu0 %v483
      %v830 = vpop.f32.mrb[0].mxu0
      %v831 = vadd.f32 %v686, %v830
      %v832 = vpop.f32.mrb[0].mxu0
      %833 = vmatprep.mubr.f32.mxu0 %v488
      %834 = vmatmul.mubr.f32.gmra.mrb[0].mxu0 %v487
      %v835 = vpop.f32.mrb[0].mxu0
      %v836 = vadd.f32 %v691, %v835
      %v837 = vpop.f32.mrb[0].mxu0
      %838 = vmatprep.mubr.f32.mxu0 %v492
      %839 = vmatmul.mubr.f32.gmra.mrb[0].mxu0 %v491
      %v840 = vpop.f32.mrb[0].mxu0
      %v841 = vadd.f32 %v696, %v840
      %v842 = vpop.f32.mrb[0].mxu0
      %843 = vmatprep.mubr.f32.mxu0 %v496
      %844 = vmatmul.mubr.f32.gmra.mrb[0].mxu0 %v495
      %v845 = vpop.f32.mrb[0].mxu0
      %v846 = vadd.f32 %v701, %v845
      %v847 = vpop.f32.mrb[0].mxu0
      %848 = vmatprep.mubr.f32.mxu0 %v500
      %849 = vmatmul.mubr.f32.gmra.mrb[0].mxu0 %v499
      %v850 = vpop.f32.mrb[0].mxu0
      %v851 = vadd.f32 %v706, %v850
      %v852 = vpop.f32.mrb[0].mxu0
      %853 = vmatprep.mubr.f32.mxu0 %v504
      %854 = vmatmul.mubr.f32.gmra.mrb[0].mxu0 %v503
      %v855 = vpop.f32.mrb[0].mxu0
      %v856 = vadd.f32 %v711, %v855
      %v857 = vpop.f32.mrb[0].mxu0
      %858 = vdwg.mxu0
      %859 = vst [vmem:[%s171] sm:$0xff] %v781
      %860 = vst [vmem:[%s171 + $0x8] sm:$0xff] %v786
      %861 = vst [vmem:[%s171 + $0x10] sm:$0xff] %v791
      %862 = vst [vmem:[%s171 + $0x18] sm:$0xff] %v796
      %863 = vst [vmem:[%s171 + $0x20] sm:$0xff] %v801
      %864 = vst [vmem:[%s171 + $0x28] sm:$0xff] %v806
      %865 = vst [vmem:[%s171 + $0x30] sm:$0xff] %v811
      %866 = vst [vmem:[%s171 + $0x38] sm:$0xff] %v816
      %867 = vst [vmem:[%s171 + $0x40] sm:$0xff] %v821
      %868 = vst [vmem:[%s171 + $0x48] sm:$0xff] %v826
      %869 = vst [vmem:[%s171 + $0x50] sm:$0xff] %v831
      %870 = vst [vmem:[%s171 + $0x58] sm:$0xff] %v836
      %871 = vst [vmem:[%s171 + $0x60] sm:$0xff] %v841
      %872 = vst [vmem:[%s171 + $0x68] sm:$0xff] %v846
      %873 = vst [vmem:[%s171 + $0x70] sm:$0xff] %v851
      %874 = vst [vmem:[%s171 + $0x78] sm:$0xff] %v856
      %p875 = scmp.lt.s32.totalorder %s17, 1
      %s876 = scalar_select %p875, %s17, 1
      %p877 = scmp.lt.s32.totalorder %s18, 0
      %s878 = scalar_select %p877, %s18, 0
      %s879 = smul.addr %s876, 16
      %s880 = sadd.s32 %s878, %s879
      %s881 = smul.addr %s880, 8
      %s882 = scalar_lea.vmem %s2, %s881
      // Predicated region
      $region29: #{image_bow_embedding.1} parent=27 // pred_check
        %p883 = pneg %p94
      $region30: #{image_bow_embedding.1} parent=27 // pred_check_branch
        %885 = sbr.rel (%p883) target = $region32
      $region31: #{image_bow_embedding.1} parent=27 // pred_region
        _
      $region32: #{image_bow_embedding.1} parent=27 // pred_fallthru
        _
    $region28: #{image_bow_embedding.1} parent=5 // pred_fallthru
      _
    %p886 = scmp.le.s32.totalorder 2, %s8
    // Predicated region
    $region33: #{image_bow_embedding.1} parent=5 // pred_check
      %p887 = pneg %p886
    $region34: #{image_bow_embedding.1} parent=5 // pred_check_branch
      %889 = sbr.rel (%p887) target = $region36
    $region35: #{image_bow_embedding.1} parent=5 // pred_region
      %s890 = ssub.s32 %s8, 2
      // Predicated region
      $region37: #{image_bow_embedding.1} parent=35 // pred_check
        %p891 = pneg %p100
      $region38: #{image_bow_embedding.1} parent=35 // pred_check_branch
        %893 = sbr.rel (%p891) target = $region40
      $region39: #{image_bow_embedding.1} parent=35 // pred_region
        %p894 = scmp.lt.s32.totalorder %s19, 1
        %s895 = scalar_select %p894, %s19, 1
        %p896 = scmp.lt.s32.totalorder %s20, 0
        %s897 = scalar_select %p896, %s20, 0
        %s898 = smul.addr %s895, 16
        %s899 = sadd.s32 %s897, %s898
        %s900 = smul.addr %s899, 8
        %s901 = scalar_lea.vmem %s2, %s900
      $region40: #{image_bow_embedding.1} parent=35 // pred_fallthru
        _
    $region36: #{image_bow_embedding.1} parent=5 // pred_fallthru
      _
  $region6: #{image_bow_embedding.1} parent=0 // loop_footer
    %s12 = sadd.s32 1, %s8
  $region7: #{image_bow_embedding.1} parent=0 // loop_footer_branch
    %7 = sbr.rel target = $region3
  $region8: #{image_bow_embedding.1} parent=0 // loop_exit
    _

</llo_original>
